<compile_context>
chip_gen: v7x
topology: tpu7x:2x2x1
jax: 0.10.0
libtpu: 0.0.40
codegen_flags: <defaults>
</compile_context>

<pallas_src>
import functools

import jax
import jax.numpy as jnp
from jax.experimental import pallas as pl
from jax.experimental.pallas import tpu as pltpu


_MAX_TILE_ROWS = 1024  # 1024 x 128 f32 = 512 KiB per pipeline buffer.


def _loss_kernel(out_ref, tgt_ref, mu_ref, lv_ref,
                 recon_ref, kld_ref, acc_ref,
                 *, n_rows, n_elems, batch, tile_r, mask_rows):
    i = pl.program_id(0)

    @pl.when(i == 0)
    def _init():
        acc_ref[...] = jnp.zeros_like(acc_ref)
        # KL divergence: mean_b( -0.5 * sum_d(1 + lv - mu^2 - exp(lv)) ).
        # mu/log_var are tiny and VMEM-resident; compute once on step 0 only.
        mu = mu_ref[...].astype(jnp.float32)
        lv = lv_ref[...].astype(jnp.float32)
        term = 1.0 + lv - mu * mu - jnp.exp(lv)
        kld_ref[0, 0] = (-0.5 * jnp.sum(term)) / jnp.float32(batch)

    # Streamed squared-error partial sums (upcast in VMEM, pure VPU adds).
    d = out_ref[...].astype(jnp.float32) - tgt_ref[...].astype(jnp.float32)
    sq = d * d
    if mask_rows:
        # Last grid block may extend past the real row count; zero the tail
        # (padded-block contents are unspecified, so the mask is load-bearing).
        row = i * tile_r + jax.lax.broadcasted_iota(jnp.int32, sq.shape, 0)
        sq = jnp.where(row < n_rows, sq, 0.0)
    acc_ref[...] += jnp.sum(sq, axis=0, keepdims=True)

    @pl.when(i == pl.num_programs(0) - 1)
    def _finalize():
        recon_ref[0, 0] = jnp.sum(acc_ref[...]) / jnp.float32(n_elems)


def recon_kld_loss(output, target, mu, log_var, lambda_kld=0.001):
    """Returns (loss, (recons_loss, kld)), matching ReconKLDivLoss.forward."""
    assert output.shape == target.shape
    n_elems = int(output.size)
    batch = int(mu.shape[0])

    out_flat = output.reshape(-1)
    tgt_flat = target.reshape(-1)
    n = out_flat.shape[0]
    rem = n % 128
    if rem:
        # Rare ragged-lane case: pad BOTH tensors identically with zeros so
        # the padded elements contribute diff == 0 to the SSE.
        pad = 128 - rem
        out_flat = jnp.pad(out_flat, (0, pad))
        tgt_flat = jnp.pad(tgt_flat, (0, pad))
    rows = out_flat.shape[0] // 128
    out2d = out_flat.reshape(rows, 128)
    tgt2d = tgt_flat.reshape(rows, 128)

    # Tile the row axis; if the array is smaller than one tile, use the full
    # extent (block == full array dim is always legal).
    tile_r = _MAX_TILE_ROWS if rows >= _MAX_TILE_ROWS else rows
    grid_rows = pl.cdiv(rows, tile_r)
    mask_rows = (rows % tile_r) != 0

    kernel = functools.partial(
        _loss_kernel, n_rows=rows, n_elems=n_elems, batch=batch,
        tile_r=tile_r, mask_rows=mask_rows)

    recon, kld = pl.pallas_call(
        kernel,
        out_shape=(
            jax.ShapeDtypeStruct((1, 1), jnp.float32),
            jax.ShapeDtypeStruct((1, 1), jnp.float32),
        ),
        grid_spec=pltpu.PrefetchScalarGridSpec(
            num_scalar_prefetch=0,
            grid=(grid_rows,),
            in_specs=[
                pl.BlockSpec((tile_r, 128), lambda i: (i, 0)),        # output slab
                pl.BlockSpec((tile_r, 128), lambda i: (i, 0)),        # target slab
                pl.BlockSpec(memory_space=pltpu.MemorySpace.VMEM),    # mu (resident)
                pl.BlockSpec(memory_space=pltpu.MemorySpace.VMEM),    # log_var
            ],
            out_specs=(
                pl.BlockSpec((1, 1), lambda i: (0, 0),
                             memory_space=pltpu.MemorySpace.SMEM),    # recon loss
                pl.BlockSpec((1, 1), lambda i: (0, 0),
                             memory_space=pltpu.MemorySpace.SMEM),    # kld
            ),
            scratch_shapes=[pltpu.VMEM((1, 128), jnp.float32)],       # SSE partials
        ),
        compiler_params=pltpu.CompilerParams(
            dimension_semantics=("arbitrary",),
        ),
    )(out2d, tgt2d, mu, log_var)

    recon = recon[0, 0]
    kld = kld[0, 0]
    loss = recon + jnp.float32(lambda_kld) * kld
    return loss, (recon, kld)


def _reference(output, target, mu, log_var, lambda_kld):
    out_f = output.astype(jnp.float32)
    tgt_f = target.astype(jnp.float32)
    recon = jnp.mean((out_f - tgt_f) ** 2)
    mu_f = mu.astype(jnp.float32)
    lv_f = log_var.astype(jnp.float32)
    kld = jnp.mean(-0.5 * jnp.sum(1 + lv_f - mu_f ** 2 - jnp.exp(lv_f), axis=1),
                   axis=0)
    return recon + lambda_kld * kld, recon, kld


if __name__ == "__main__":
    key = jax.random.PRNGKey(0)
    k1, k2, k3, k4 = jax.random.split(key, 4)

    # --- Primary check: shapes implied by the module (VAE recon + latent stats).
    output = jax.random.normal(k1, (2, 4, 16, 16), dtype=jnp.float32)
    target = jax.random.normal(k2, (2, 4, 16, 16), dtype=jnp.float32)
    mu = jax.random.normal(k3, (2, 32), dtype=jnp.float32)
    log_var = 0.1 * jax.random.normal(k4, (2, 32), dtype=jnp.float32)

    loss, (recon, kld) = recon_kld_loss(output, target, mu, log_var, lambda_kld=0.001)
    jax.block_until_ready((loss, recon, kld))

    loss_ref, recon_ref, kld_ref = _reference(output, target, mu, log_var, 0.001)
    assert jnp.allclose(recon, recon_ref, rtol=1e-5, atol=1e-6)
    assert jnp.allclose(kld, kld_ref, rtol=1e-5, atol=1e-6)
    assert jnp.allclose(loss, loss_ref, rtol=1e-5, atol=1e-6)

    # --- Multi-tile streamed path (grid > 1, ragged last row-tile is masked).
    o2 = jax.random.normal(k1, (2, 8, 96, 96), dtype=jnp.float32)  # 1152 rows -> 2 steps
    t2 = jax.random.normal(k2, (2, 8, 96, 96), dtype=jnp.float32)
    loss2, (recon2, kld2) = recon_kld_loss(o2, t2, mu, log_var)
    jax.block_until_ready(loss2)
    loss2_ref, recon2_ref, _ = _reference(o2, t2, mu, log_var, 0.001)
    assert jnp.allclose(recon2, recon2_ref, rtol=1e-4, atol=1e-5)
    assert jnp.allclose(loss2, loss2_ref, rtol=1e-4, atol=1e-5)

    # --- Non-multiple-of-128 element count (wrapper lane-padding fallback).
    o3 = jax.random.normal(k3, (2, 3, 15, 15), dtype=jnp.float32)
    t3 = jax.random.normal(k4, (2, 3, 15, 15), dtype=jnp.float32)
    loss3, (recon3, _) = recon_kld_loss(o3, t3, mu, log_var)
    jax.block_until_ready(loss3)
    loss3_ref, recon3_ref, _ = _reference(o3, t3, mu, log_var, 0.001)
    assert jnp.allclose(recon3, recon3_ref, rtol=1e-5, atol=1e-6)
    assert jnp.allclose(loss3, loss3_ref, rtol=1e-5, atol=1e-6)

    # --- bf16 inputs stream un-cast from HBM (upcast happens inside the kernel).
    o4 = output.astype(jnp.bfloat16)
    t4 = target.astype(jnp.bfloat16)
    loss4, (recon4, _) = recon_kld_loss(o4, t4, mu, log_var)
    jax.block_until_ready(loss4)
    loss4_ref, recon4_ref, _ = _reference(o4, t4, mu, log_var, 0.001)
    assert jnp.allclose(recon4, recon4_ref, rtol=1e-5, atol=1e-6)

    print("KERNEL_OK")
</pallas_src>

<mosaic_0001>
module attributes {stable_mosaic.version = 11 : i64} {
  func.func @_loss_kernel(%arg0: i32, %arg1: memref<16x128xf32, #tpu.memory_space<vmem>>, %arg2: memref<16x128xf32, #tpu.memory_space<vmem>>, %arg3: memref<2x32xf32, #tpu.memory_space<vmem>>, %arg4: memref<2x32xf32, #tpu.memory_space<vmem>>, %arg5: memref<1x1xf32, #tpu.memory_space<smem>>, %arg6: memref<1x1xf32, #tpu.memory_space<smem>>, %arg7: memref<1x128xf32, #tpu.memory_space<vmem>>) attributes {dimension_semantics = [#tpu.dimension_semantics<arbitrary>], iteration_bounds = array<i64: 1>, scalar_prefetch = 0 : i64, scratch_operands = 1 : i64, tpu.core_type = #tpu.core_type<tc>, window_params = [{transform_indices = @transform_0, window_bounds = array<i64: 16, 128>}, {transform_indices = @transform_1, window_bounds = array<i64: 16, 128>}, {pipeline_mode = #tpu.pipeline_mode<synchronous>, transform_indices = @transform_2, window_bounds = array<i64: 2, 32>}, {pipeline_mode = #tpu.pipeline_mode<synchronous>, transform_indices = @transform_3, window_bounds = array<i64: 2, 32>}, {transform_indices = @transform_4, window_bounds = array<i64: 1, 1>}, {transform_indices = @transform_5, window_bounds = array<i64: 1, 1>}]} {
    %c0_i32 = arith.constant 0 : i32
    %0 = arith.cmpi eq, %arg0, %c0_i32 : i32
    %1 = arith.extui %0 : i1 to i32
    %c0_i32_0 = arith.constant 0 : i32
    %2 = arith.cmpi ne, %1, %c0_i32_0 : i32
    scf.if %2 {
      %cst_10 = arith.constant 0.000000e+00 : f32
      %15 = vector.broadcast %cst_10 : f32 to vector<1x128xf32>
      %c0_11 = arith.constant 0 : index
      %c0_12 = arith.constant 0 : index
      %16 = vector.load %arg7[%c0_11, %c0_12] : memref<1x128xf32, #tpu.memory_space<vmem>>, vector<1x128xf32>
      tpu.vector_store %arg7[%c0_11, %c0_12], %15 {strides = array<i32>} : memref<1x128xf32, #tpu.memory_space<vmem>>, vector<1x128xf32>,
      %c0_13 = arith.constant 0 : index
      %c0_14 = arith.constant 0 : index
      %17 = vector.load %arg3[%c0_13, %c0_14] : memref<2x32xf32, #tpu.memory_space<vmem>>, vector<2x32xf32>
      %c0_15 = arith.constant 0 : index
      %c0_16 = arith.constant 0 : index
      %18 = vector.load %arg4[%c0_15, %c0_16] : memref<2x32xf32, #tpu.memory_space<vmem>>, vector<2x32xf32>
      %cst_17 = arith.constant 1.000000e+00 : f32
      %19 = vector.broadcast %cst_17 : f32 to vector<2x32xf32>
      %20 = arith.addf %19, %18 : vector<2x32xf32>
      %21 = arith.mulf %17, %17 : vector<2x32xf32>
      %22 = arith.subf %20, %21 : vector<2x32xf32>
      %23 = math.exp %18 : vector<2x32xf32>
      %24 = arith.subf %22, %23 : vector<2x32xf32>
      %25 = vector.shape_cast %24 : vector<2x32xf32> to vector<1x2x32xf32>
      %cst_18 = arith.constant dense<0.000000e+00> : vector<1xf32>
      %26 = vector.multi_reduction <add>, %25, %cst_18 [1, 2] : vector<1x2x32xf32> to vector<1xf32>
      %27 = vector.shape_cast %26 : vector<1xf32> to vector<1x1x1xf32>
      %28 = vector.extract %27[0, 0, 0] : f32 from vector<1x1x1xf32>
      %cst_19 = arith.constant -5.000000e-01 : f32
      %29 = arith.mulf %cst_19, %28 : f32
      %cst_20 = arith.constant 2.000000e+00 : f32
      %30 = arith.divf %29, %cst_20 : f32
      %c0_21 = arith.constant 0 : index
      %c0_22 = arith.constant 0 : index
      %31 = memref.load %arg6[%c0_21, %c0_22] : memref<1x1xf32, #tpu.memory_space<smem>>
      memref.store %30, %arg6[%c0_21, %c0_22] : memref<1x1xf32, #tpu.memory_space<smem>>
    } else {
    }
    %c0 = arith.constant 0 : index
    %c0_1 = arith.constant 0 : index
    %3 = vector.load %arg1[%c0, %c0_1] : memref<16x128xf32, #tpu.memory_space<vmem>>, vector<16x128xf32>
    %c0_2 = arith.constant 0 : index
    %c0_3 = arith.constant 0 : index
    %4 = vector.load %arg2[%c0_2, %c0_3] : memref<16x128xf32, #tpu.memory_space<vmem>>, vector<16x128xf32>
    %5 = arith.subf %3, %4 : vector<16x128xf32>
    %6 = arith.mulf %5, %5 : vector<16x128xf32>
    %c0_4 = arith.constant 0 : index
    %c0_5 = arith.constant 0 : index
    %7 = vector.load %arg7[%c0_4, %c0_5] : memref<1x128xf32, #tpu.memory_space<vmem>>, vector<1x128xf32>
    %cst = arith.constant dense<0.000000e+00> : vector<128xf32>
    %8 = vector.multi_reduction <add>, %6, %cst [0] : vector<16x128xf32> to vector<128xf32>
    %9 = vector.shape_cast %8 : vector<128xf32> to vector<1x128xf32>
    %10 = arith.addf %7, %9 : vector<1x128xf32>
    %c0_6 = arith.constant 0 : index
    %c0_7 = arith.constant 0 : index
    %11 = vector.load %arg7[%c0_6, %c0_7] : memref<1x128xf32, #tpu.memory_space<vmem>>, vector<1x128xf32>
    tpu.vector_store %arg7[%c0_6, %c0_7], %10 {strides = array<i32>} : memref<1x128xf32, #tpu.memory_space<vmem>>, vector<1x128xf32>,
    %c0_i32_8 = arith.constant 0 : i32
    %12 = arith.cmpi eq, %arg0, %c0_i32_8 : i32
    %13 = arith.extui %12 : i1 to i32
    %c0_i32_9 = arith.constant 0 : i32
    %14 = arith.cmpi ne, %13, %c0_i32_9 : i32
    scf.if %14 {
      %c0_10 = arith.constant 0 : index
      %c0_11 = arith.constant 0 : index
      %15 = vector.load %arg7[%c0_10, %c0_11] : memref<1x128xf32, #tpu.memory_space<vmem>>, vector<1x128xf32>
      %16 = vector.shape_cast %15 : vector<1x128xf32> to vector<1x1x128xf32>
      %cst_12 = arith.constant dense<0.000000e+00> : vector<1xf32>
      %17 = vector.multi_reduction <add>, %16, %cst_12 [1, 2] : vector<1x1x128xf32> to vector<1xf32>
      %18 = vector.shape_cast %17 : vector<1xf32> to vector<1x1x1xf32>
      %19 = vector.extract %18[0, 0, 0] : f32 from vector<1x1x1xf32>
      %cst_13 = arith.constant 2.048000e+03 : f32
      %20 = arith.divf %19, %cst_13 : f32
      %c0_14 = arith.constant 0 : index
      %c0_15 = arith.constant 0 : index
      %21 = memref.load %arg5[%c0_14, %c0_15] : memref<1x1xf32, #tpu.memory_space<smem>>
      memref.store %20, %arg5[%c0_14, %c0_15] : memref<1x1xf32, #tpu.memory_space<smem>>
    } else {
    }
    return
  }
  func.func @transform_0(%arg0: i32) -> (i32, i32) {
    %c0_i32 = arith.constant 0 : i32
    %c0_i32_0 = arith.constant 0 : i32
    return %arg0, %c0_i32 : i32, i32
  }
  func.func @transform_1(%arg0: i32) -> (i32, i32) {
    %c0_i32 = arith.constant 0 : i32
    %c0_i32_0 = arith.constant 0 : i32
    return %arg0, %c0_i32 : i32, i32
  }
  func.func @transform_2(%arg0: i32) -> (i32, i32) {
    %c0_i32 = arith.constant 0 : i32
    %c0_i32_0 = arith.constant 0 : i32
    %c0_i32_1 = arith.constant 0 : i32
    return %c0_i32, %c0_i32_0 : i32, i32
  }
  func.func @transform_3(%arg0: i32) -> (i32, i32) {
    %c0_i32 = arith.constant 0 : i32
    %c0_i32_0 = arith.constant 0 : i32
    %c0_i32_1 = arith.constant 0 : i32
    return %c0_i32, %c0_i32_0 : i32, i32
  }
  func.func @transform_4(%arg0: i32) -> (i32, i32) {
    %c0_i32 = arith.constant 0 : i32
    %c0_i32_0 = arith.constant 0 : i32
    %c0_i32_1 = arith.constant 0 : i32
    return %c0_i32, %c0_i32_0 : i32, i32
  }
  func.func @transform_5(%arg0: i32) -> (i32, i32) {
    %c0_i32 = arith.constant 0 : i32
    %c0_i32_0 = arith.constant 0 : i32
    %c0_i32_1 = arith.constant 0 : i32
    return %c0_i32, %c0_i32_0 : i32, i32
  }
}

</mosaic_0001>

<llo_original>
// kernel: tpu_custom_call.1
$region0: #{tpu_custom_call.1}
  #allocation0 [shape = 'u32[]', space=smem, size = 0x4, offset = 0x4, fixed_abs, tag = 'smem constant byte address 0x4 - core index']
  #allocation1 [shape = 'u32[144,128]{1,0:T(1,128)}', space=vmem, size = 0x12000, scoped, tag = 'internal scratch']
  #allocation2 [shape = 'f32[1,128]{1,0:T(1,128)}', space=vmem, size = 0x200, scoped, tag = 'scratch operand']
  %s0 = inlined_call_operand.hbm [shape: f32[16,128], index: 0, kind: input, shape index: {}]
  %s1 = inlined_call_operand.hbm [shape: f32[16,128], index: 1, kind: input, shape index: {}]
  %s2 = inlined_call_operand.vmem [shape: f32[2,32], index: 2, kind: input, shape index: {}]
  %s3 = inlined_call_operand.vmem [shape: f32[2,32], index: 3, kind: input, shape index: {}]
  %s4 = inlined_call_operand.hbm [shape: f32[1,1], index: 4, kind: output, shape index: {0}]
  %s5 = inlined_call_operand.hbm [shape: f32[1,1], index: 5, kind: output, shape index: {1}]
  %6 = xla_tuple %s4, %s5
  %s7 = sld [smem:[#allocation0]]
  $region50: #{tpu_custom_call.1} parent=0
    _
  %s9 = ssub.s32 1, %s7
  %s10 = scalar_select 0, %s9, %s7
  $region1: #{tpu_custom_call.1} parent=0
    #allocation3 [shape = 'u8[8192]{0}', space=vmem, size = 0x2000, scoped, tag = 'input window, operand 0, single buffered']
    #allocation4 [shape = 's32[1]{0}', space=sflag, size = 0x4, scoped, tag = 'scoped memory for tpu_custom_call.1']
    #allocation5 [shape = 's32[1]{0}', space=sflag, size = 0x4, scoped, tag = 'scoped memory for tpu_custom_call.1']
    #allocation6 [shape = 'u8[8192]{0}', space=vmem, size = 0x2000, scoped, tag = 'input window, operand 1, single buffered']
    #allocation7 [shape = 's32[1]{0}', space=sflag, size = 0x4, scoped, tag = 'scoped memory for tpu_custom_call.1']
    #allocation8 [shape = 'u8[512]{0}', space=smem, size = 0x200, scoped, tag = 'output window, operand 0, single buffered']
    #allocation9 [shape = 'u8[512]{0}', space=smem, size = 0x200, scoped, tag = 'output window, operand 1, single buffered']
    #allocation10 [shape = 's32[1]{0}', space=sflag, size = 0x4, scoped, tag = 'scoped memory for tpu_custom_call.1']
    %11 = vsyncpa [#allocation4], 0
    %12 = vsyncpa [#allocation7], 0
    %13 = vsyncpa [#allocation5], 0
    %14 = vsyncpa [#allocation10], 0
    // Predicated region
    $region2: #{tpu_custom_call.1} parent=1 // pred_check
      _
    $region3: #{tpu_custom_call.1} parent=1 // pred_check_branch
      %16 = sbr.rel (0) target = $region5
    $region4: #{tpu_custom_call.1} parent=1 // pred_region
      %s18 = ssub.s32 256, 256
      %19 = vsyncadd [#allocation4], %s18
      %s20 = sshll.u32 [#allocation3], 4
      %s21 = int_to_ptr.vmem [resolvable:$true] %s20
      %26 = dma.hbm_to_vmem [thread:$0]  %s0, 256, %s21, [#allocation4], 128, 128, 8
    $region5: #{tpu_custom_call.1} parent=1 // pred_fallthru
      _
    // Predicated region
    $region6: #{tpu_custom_call.1} parent=1 // pred_check
      _
    $region7: #{tpu_custom_call.1} parent=1 // pred_check_branch
      %28 = sbr.rel (0) target = $region9
    $region8: #{tpu_custom_call.1} parent=1 // pred_region
      %s30 = ssub.s32 256, 256
      %31 = vsyncadd [#allocation7], %s30
      %s32 = sshll.u32 [#allocation6], 4
      %s33 = int_to_ptr.vmem [resolvable:$true] %s32
      %38 = dma.hbm_to_vmem [thread:$0]  %s1, 256, %s33, [#allocation7], 128, 128, 8
    $region9: #{tpu_custom_call.1} parent=1 // pred_fallthru
      _
    // Predicated region
    $region10: #{tpu_custom_call.1} parent=1 // pred_check
      _
    $region11: #{tpu_custom_call.1} parent=1 // pred_check_branch
      %40 = sbr.rel (0) target = $region13
    $region12: #{tpu_custom_call.1} parent=1 // pred_region
      _
    $region13: #{tpu_custom_call.1} parent=1 // pred_fallthru
      _
    // Predicated region
    $region14: #{tpu_custom_call.1} parent=1 // pred_check
      _
    $region15: #{tpu_custom_call.1} parent=1 // pred_check_branch
      %42 = sbr.rel (0) target = $region17
    $region16: #{tpu_custom_call.1} parent=1 // pred_region
      _
    $region17: #{tpu_custom_call.1} parent=1 // pred_fallthru
      _
    // Predicated region
    $region18: #{tpu_custom_call.1} parent=1 // pred_check
      _
    $region19: #{tpu_custom_call.1} parent=1 // pred_check_branch
      %44 = sbr.rel (0) target = $region21
    $region20: #{tpu_custom_call.1} parent=1 // pred_region
      %45 = dma.done [#allocation4], 256
    $region21: #{tpu_custom_call.1} parent=1 // pred_fallthru
      _
    // Predicated region
    $region22: #{tpu_custom_call.1} parent=1 // pred_check
      _
    $region23: #{tpu_custom_call.1} parent=1 // pred_check_branch
      %47 = sbr.rel (0) target = $region25
    $region24: #{tpu_custom_call.1} parent=1 // pred_region
      %48 = dma.done [#allocation7], 256
    $region25: #{tpu_custom_call.1} parent=1 // pred_fallthru
      _
    %p49 = scmp.eq.s32.totalorder 0, 0
    // Predicated region
    $region26: #{tpu_custom_call.1} parent=1 // pred_check
      %p50 = pneg %p49
    $region27: #{tpu_custom_call.1} parent=1 // pred_check_branch
      %52 = sbr.rel (%p50) target = $region29
    $region28: #{tpu_custom_call.1} parent=1 // pred_region
      %53 = vst [vmem:[#allocation2] sm:$0x1] 0.0
      %v54 = vld [vmem:[%s2] sm:$0x3]
      %v55 = vld [vmem:[%s3] sm:$0x3]
      %v56 = vadd.f32 %v55, 1.0
      %v57 = vmul.f32 %v54, %v54
      %v58 = vsub.f32 %v56, %v57
      %v59 = vmul.f32 %v55, 1.442695
      %v60 = vpow.pop %v59
      %v61 = vsub.f32 %v58, %v60
      %vm62 = vcmask 254976
      %v63 = vsel %vm62, %v61, 0.0
      %64 = vadd.xlane.f32.xlu0 %v63
      %v65 = vpop.xlane.xlu0 %64
      %v66 = vrot.slane %v65, 4
      %v67 = vadd.f32 %v65, %v66
      %v68 = vrot.slane %v67, 2
      %v69 = vadd.f32 %v67, %v68
      %v70 = vrot.slane %v69, 1
      %v71 = vadd.f32 %v69, %v70
      %s72 = vtos %v71
      %s73 = smul.f32 %s72, -0.5
      %v74 = vrcp.pop 2.0
      %s75 = vtos %v74
      %s76 = smul.f32 %s73, %s75
      %s77 = scalar_lea.smem [#allocation9], 0
      %78 = sst [smem:[%s77]] %s76
    $region29: #{tpu_custom_call.1} parent=1 // pred_fallthru
      _
    %v79 = vld [vmem:[#allocation3] sm:$0xff]
    %v80 = vld [vmem:[#allocation3 + $0x8] sm:$0xff]
    %v81 = vld [vmem:[#allocation6] sm:$0xff]
    %v82 = vld [vmem:[#allocation6 + $0x8] sm:$0xff]
    %v83 = vsub.f32 %v79, %v81
    %v84 = vsub.f32 %v80, %v82
    %v85 = vmul.f32 %v83, %v83
    %v86 = vmul.f32 %v84, %v84
    %v87 = vld [vmem:[#allocation2] sm:$0x1]
    %v88 = vadd.f32 %v85, %v86
    %v89 = vrot.slane %v88, 4
    %v90 = vadd.f32 %v88, %v89
    %v91 = vrot.slane %v90, 2
    %v92 = vadd.f32 %v90, %v91
    %v93 = vrot.slane %v92, 1
    %v94 = vadd.f32 %v92, %v93
    %v95 = vadd.f32 %v87, %v94
    %96 = vst [vmem:[#allocation2] sm:$0x1] %v95
    // Predicated region
    $region30: #{tpu_custom_call.1} parent=1 // pred_check
      %p97 = pneg %p49
    $region31: #{tpu_custom_call.1} parent=1 // pred_check_branch
      %99 = sbr.rel (%p97) target = $region33
    $region32: #{tpu_custom_call.1} parent=1 // pred_region
      %v100 = vld [vmem:[#allocation2] sm:$0x1]
      %vm101 = vcmask 1040384
      %v102 = vsel %vm101, %v100, 0.0
      %103 = vadd.xlane.f32.xlu0 %v102
      %v104 = vpop.xlane.xlu0 %103
      %v105 = vrot.slane %v104, 4
      %v106 = vadd.f32 %v104, %v105
      %v107 = vrot.slane %v106, 2
      %v108 = vadd.f32 %v106, %v107
      %v109 = vrot.slane %v108, 1
      %v110 = vadd.f32 %v108, %v109
      %s111 = vtos %v110
      %v112 = vrcp.pop 2048.0
      %s113 = vtos %v112
      %s114 = smul.f32 %s111, %s113
      %s115 = scalar_lea.smem [#allocation8], 0
      %116 = sst [smem:[%s115]] %s114
    $region33: #{tpu_custom_call.1} parent=1 // pred_fallthru
      _
    // Predicated region
    $region34: #{tpu_custom_call.1} parent=1 // pred_check
      _
    $region35: #{tpu_custom_call.1} parent=1 // pred_check_branch
      %118 = sbr.rel (0) target = $region37
    $region36: #{tpu_custom_call.1} parent=1 // pred_region
      %s120 = ssub.s32 16, 16
      %121 = vsyncadd [#allocation5], %s120
      %124 = dma.smem_to_hbm [#allocation8], 16, %s4, [#allocation5]
    $region37: #{tpu_custom_call.1} parent=1 // pred_fallthru
      _
    // Predicated region
    $region38: #{tpu_custom_call.1} parent=1 // pred_check
      _
    $region39: #{tpu_custom_call.1} parent=1 // pred_check_branch
      %126 = sbr.rel (0) target = $region41
    $region40: #{tpu_custom_call.1} parent=1 // pred_region
      %s128 = ssub.s32 16, 16
      %129 = vsyncadd [#allocation10], %s128
      %132 = dma.smem_to_hbm [#allocation9], 16, %s5, [#allocation10]
    $region41: #{tpu_custom_call.1} parent=1 // pred_fallthru
      _
    // Predicated region
    $region42: #{tpu_custom_call.1} parent=1 // pred_check
      _
    $region43: #{tpu_custom_call.1} parent=1 // pred_check_branch
      %134 = sbr.rel (0) target = $region45
    $region44: #{tpu_custom_call.1} parent=1 // pred_region
      %135 = dma.done [#allocation5], 16
    $region45: #{tpu_custom_call.1} parent=1 // pred_fallthru
      _
    // Predicated region
    $region46: #{tpu_custom_call.1} parent=1 // pred_check
      _
    $region47: #{tpu_custom_call.1} parent=1 // pred_check_branch
      %137 = sbr.rel (0) target = $region49
    $region48: #{tpu_custom_call.1} parent=1 // pred_region
      %138 = dma.done [#allocation10], 16
    $region49: #{tpu_custom_call.1} parent=1 // pred_fallthru
      _
    %139 = sfence
    %140 = vsyncpa [#allocation4], 1
    %141 = vsyncpa [#allocation7], 1
    %142 = vsyncpa [#allocation5], 1
    %143 = vsyncpa [#allocation10], 1

</llo_original>
